<compile_context>
chip_gen: v7x
topology: tpu7x:2x2x1
jax: 0.10.0
libtpu: 0.0.40
codegen_flags: <defaults>
</compile_context>

<pallas_src>
import functools

import jax
import jax.numpy as jnp
from jax import lax
from jax.experimental import pallas as pl
from jax.experimental.pallas import tpu as pltpu


def _round_up(x, m):
    return ((x + m - 1) // m) * m


def _layer_norm(x, gamma, beta, eps=1e-5):
    mu = jnp.mean(x, axis=-1, keepdims=True)
    var = jnp.mean((x - mu) * (x - mu), axis=-1, keepdims=True)
    return (x - mu) * lax.rsqrt(var + eps) * gamma + beta


# Row layout of the packed [8, max(fc1, fc2)] vector block.
_B1, _G1, _BE1, _B2, _G2, _BE2, _BA, _WQ = range(8)


def _critic_kernel(obs_ref, w1_ref, w2_ref, wa_ref, vec_ref, bq_ref, out_ref,
                   *, input_dim, n_actions, fc1, fc2):
    obs = obs_ref[...]                       # [TM, input_dim + n_actions] f32

    # fc1 (MXU, bf16 operands, f32 accumulation).  W1 carries n_actions zero
    # rows, so feeding the fused [state | action] block is exact.
    h1 = jnp.dot(obs.astype(jnp.bfloat16), w1_ref[...],
                 preferred_element_type=jnp.float32)
    h1 = h1 + vec_ref[_B1:_B1 + 1, :fc1]
    h1 = jnp.maximum(
        _layer_norm(h1, vec_ref[_G1:_G1 + 1, :fc1],
                    vec_ref[_BE1:_BE1 + 1, :fc1]), 0.0)

    # fc2 (MXU) -> LayerNorm2 (no relu yet, matches the PyTorch module).
    h2 = jnp.dot(h1.astype(jnp.bfloat16), w2_ref[...],
                 preferred_element_type=jnp.float32)
    h2 = h2 + vec_ref[_B2:_B2 + 1, :fc2]
    h2 = _layer_norm(h2, vec_ref[_G2:_G2 + 1, :fc2],
                     vec_ref[_BE2:_BE2 + 1, :fc2])

    # Action branch on the VPU: K = n_actions is tiny, keep it as unrolled
    # FMAs rather than staging a K=4 contraction into the MXU.
    wa = wa_ref[...]                                        # [n_act, fc2] f32
    av = jnp.broadcast_to(vec_ref[_BA:_BA + 1, :fc2], h2.shape)
    for k in range(n_actions):                              # static unroll
        av = av + obs[:, input_dim + k:input_dim + k + 1] * wa[k:k + 1, :]
    av = jnp.maximum(av, 0.0)

    # Fuse + relu, then the N=1 projection on the (idle) MXU, producing the
    # result directly lane-major: [1, TM].  No XLU lane reduce, no transpose.
    sa = jnp.maximum(h2 + av, 0.0)
    wq = vec_ref[_WQ:_WQ + 1, :fc2]
    q = lax.dot_general(wq.astype(jnp.bfloat16), sa.astype(jnp.bfloat16),
                        dimension_numbers=(((1,), (1,)), ((), ())),
                        preferred_element_type=jnp.float32)      # [1, TM]
    q = q + bq_ref[0, 0]                                         # SMEM scalar
    out_ref[...] = q.reshape(out_ref.shape).astype(out_ref.dtype)


def pack_params(params):
    """One-time repack of module-shaped params into the kernel layout."""
    n_actions, fc2 = params["wa"].shape
    input_dim, fc1 = params["w1"].shape
    width = max(fc1, fc2)

    def row(v):
        v = jnp.asarray(v, jnp.float32).reshape(1, -1)
        return jnp.pad(v, ((0, 0), (0, width - v.shape[1])))

    vecs = jnp.concatenate(
        [row(params[k]) for k in
         ("b1", "g1", "be1", "b2", "g2", "be2", "ba", "wq")], axis=0)  # [8, width]
    w1p = jnp.concatenate(
        [jnp.asarray(params["w1"], jnp.bfloat16),
         jnp.zeros((n_actions, fc1), jnp.bfloat16)], axis=0)   # [in+act, fc1]
    return dict(
        w1p=w1p,
        w2=jnp.asarray(params["w2"], jnp.bfloat16),
        wa=jnp.asarray(params["wa"], jnp.float32),
        vecs=vecs,
        bq=jnp.asarray(params["bq"], jnp.float32).reshape(1, 1),
    )


def critic_forward(state, action, packed, *, tile_m=None):
    """state: [B, input_dim] f32, action: [B, n_actions] f32 -> [B, 1] f32."""
    B, input_dim = state.shape
    n_actions = action.shape[1]
    fc1 = packed["w1p"].shape[1]
    fc2 = packed["wa"].shape[1]
    assert packed["w1p"].shape[0] == input_dim + n_actions

    if tile_m is None:
        if B <= 8:
            tile_m = 8
        else:
            # >= 2 grid steps (lets "parallel" feed both v7x TensorCores) but
            # tiles as large as possible (cap 1024) so per-step pipeline
            # overhead stays amortized on single-core v5e/v6e.
            tile_m = min(1024, _round_up(pl.cdiv(B, 2), 8))
    tile_m = max(8, _round_up(tile_m, 8))

    Bp = _round_up(max(B, tile_m), tile_m)

    # Fuse state and action into one lane-contiguous input block (W1 has
    # matching zero rows, so obs @ W1p == state @ W1 exactly).
    obs = jnp.concatenate([state, action], axis=1)
    if Bp != B:
        obs = jnp.pad(obs, ((0, Bp - B), (0, 0)))

    num_tiles = Bp // tile_m

    def resident(arr):
        r, c = arr.shape
        # Constant block index -> weights stay VMEM-resident across tiles.
        return pl.BlockSpec((r, c), lambda i: (0, 0))

    kernel = functools.partial(_critic_kernel, input_dim=input_dim,
                               n_actions=n_actions, fc1=fc1, fc2=fc2)

    weight_bytes = sum(int(packed[k].size) * packed[k].dtype.itemsize
                       for k in ("w1p", "w2", "wa", "vecs", "bq"))
    cost = pl.CostEstimate(
        flops=int(2 * Bp * ((input_dim + n_actions) * fc1 + fc1 * fc2
                            + n_actions * fc2 + fc2)),
        transcendentals=int(2 * Bp),                 # one rsqrt per LN row
        bytes_accessed=int(weight_bytes + Bp * (input_dim + n_actions + 1) * 4),
    )

    out = pl.pallas_call(
        kernel,
        out_shape=jax.ShapeDtypeStruct((num_tiles, 1, tile_m), jnp.float32),
        grid=(num_tiles,),
        in_specs=[
            pl.BlockSpec((tile_m, input_dim + n_actions), lambda i: (i, 0)),
            resident(packed["w1p"]),
            resident(packed["w2"]),
            resident(packed["wa"]),
            resident(packed["vecs"]),
            pl.BlockSpec(memory_space=pltpu.MemorySpace.SMEM),   # bq scalar
        ],
        # Lane-dense output block: [1, 1, tile_m] per grid step.
        out_specs=pl.BlockSpec((1, 1, tile_m), lambda i: (i, 0, 0)),
        compiler_params=pltpu.CompilerParams(
            dimension_semantics=("parallel",)),
        cost_estimate=cost,
    )(obs, packed["w1p"], packed["w2"], packed["wa"], packed["vecs"],
      packed["bq"])

    return out.reshape(Bp, 1)[:B]


def make_params(key, input_dim, n_actions, fc1_dims=256, fc2_dims=256):
    """Init mirroring CriticNetwork.__init__ (uniform bounds of that module).

    Weights are stored transposed to [in, out] for x @ W.  W1/W2 are kept in
    bf16 (MXU operands); Wa is f32 (VPU path); Wq is a [1, fc2] f32 row.
    """
    ks = jax.random.split(key, 8)

    def unif(k, shape, bound):
        return jax.random.uniform(k, shape, jnp.float32, -bound, bound)

    f1 = fc1_dims ** -0.5      # init_weights: 1/sqrt(weight.size(0)) = 1/sqrt(out)
    f2 = fc2_dims ** -0.5
    fa = 0.003                 # init_weights(self.fc_a, f_val=0.003)
    fq = fc2_dims ** -0.5      # fc_q keeps PyTorch default Linear init (fan-in)

    return dict(
        w1=unif(ks[0], (input_dim, fc1_dims), f1).astype(jnp.bfloat16),
        b1=unif(ks[1], (1, fc1_dims), f1),
        g1=jnp.ones((1, fc1_dims), jnp.float32),
        be1=jnp.zeros((1, fc1_dims), jnp.float32),
        w2=unif(ks[2], (fc1_dims, fc2_dims), f2).astype(jnp.bfloat16),
        b2=unif(ks[3], (1, fc2_dims), f2),
        g2=jnp.ones((1, fc2_dims), jnp.float32),
        be2=jnp.zeros((1, fc2_dims), jnp.float32),
        wa=unif(ks[4], (n_actions, fc2_dims), fa),
        ba=unif(ks[5], (1, fc2_dims), fa),
        wq=unif(ks[6], (1, fc2_dims), fq),       # row layout
        bq=unif(ks[7], (1, 1), fq),
    )


def critic_forward_ref(state, action, p):
    """Pure-JAX reference matching the kernel numerics (bf16 MXU operands,
    f32 accumulation and element-wise math)."""
    def ln(x, g, b, eps=1e-5):
        mu = jnp.mean(x, axis=-1, keepdims=True)
        var = jnp.mean((x - mu) ** 2, axis=-1, keepdims=True)
        return (x - mu) * lax.rsqrt(var + eps) * g + b

    h1 = jnp.dot(state.astype(jnp.bfloat16), p["w1"],
                 preferred_element_type=jnp.float32) + p["b1"]
    h1 = jax.nn.relu(ln(h1, p["g1"], p["be1"]))
    h2 = jnp.dot(h1.astype(jnp.bfloat16), p["w2"],
                 preferred_element_type=jnp.float32) + p["b2"]
    h2 = ln(h2, p["g2"], p["be2"])
    # exact f32 FMA accumulation, like the kernel's unrolled action branch
    av = jax.nn.relu(
        jnp.sum(action[:, :, None] * p["wa"][None, :, :], axis=1) + p["ba"])
    sa = jax.nn.relu(h2 + av)
    q = lax.dot_general(p["wq"].astype(jnp.bfloat16), sa.astype(jnp.bfloat16),
                        dimension_numbers=(((1,), (1,)), ((), ())),
                        preferred_element_type=jnp.float32)
    return q.T + p["bq"]


def critic_forward_ref_f32(state, action, p):
    """Full-f32 reference (module semantics) for a looser sanity check."""
    def ln(x, g, b, eps=1e-5):
        mu = jnp.mean(x, axis=-1, keepdims=True)
        var = jnp.mean((x - mu) ** 2, axis=-1, keepdims=True)
        return (x - mu) * lax.rsqrt(var + eps) * g + b

    w1 = p["w1"].astype(jnp.float32)
    w2 = p["w2"].astype(jnp.float32)
    h1 = jax.nn.relu(ln(state @ w1 + p["b1"], p["g1"], p["be1"]))
    h2 = ln(h1 @ w2 + p["b2"], p["g2"], p["be2"])
    av = jax.nn.relu(action @ p["wa"] + p["ba"])
    sa = jax.nn.relu(h2 + av)
    return jnp.sum(sa * p["wq"], axis=-1, keepdims=True) + p["bq"]


if __name__ == "__main__":
    B = 32
    INPUT_DIM = 16     # input_dims
    N_ACTIONS = 4      # n_actions
    FC1, FC2 = 256, 256
    TILE_M = 8         # small tile so the batch grid (4 steps) is exercised

    key = jax.random.PRNGKey(0)
    k_state, k_action, k_params = jax.random.split(key, 3)

    state = jax.random.normal(k_state, (B, INPUT_DIM), jnp.float32)
    action = jax.random.normal(k_action, (B, N_ACTIONS), jnp.float32)
    params = make_params(k_params, INPUT_DIM, N_ACTIONS, FC1, FC2)
    packed = pack_params(params)

    q_ref = critic_forward_ref(state, action, params)
    q_f32 = critic_forward_ref_f32(state, action, params)

    # Explicit small tile (4 grid steps).
    q = critic_forward(state, action, packed, tile_m=TILE_M)
    q = jax.block_until_ready(q)
    assert q.shape == (B, 1), q.shape
    assert jnp.allclose(q, q_ref, atol=2e-3, rtol=2e-3), (q, q_ref)
    assert jnp.allclose(q, q_f32, atol=5e-2, rtol=5e-2), (q, q_f32)

    # Default tiling (2 grid steps for this batch).
    q2 = jax.block_until_ready(critic_forward(state, action, packed))
    assert q2.shape == (B, 1), q2.shape
    assert jnp.allclose(q2, q_ref, atol=2e-3, rtol=2e-3), (q2, q_ref)

    # TODO(synk): optimizer / checkpoint I/O of the PyTorch module are training
    # utilities, not part of the forward pass, and are intentionally omitted.
    print("KERNEL_OK")
</pallas_src>

<mosaic_0001>
module attributes {stable_mosaic.version = 11 : i64} {
  func.func @_critic_kernel(%arg0: i32, %arg1: memref<8x20xf32, #tpu.memory_space<vmem>>, %arg2: memref<20x256xbf16, #tpu.memory_space<vmem>>, %arg3: memref<256x256xbf16, #tpu.memory_space<vmem>>, %arg4: memref<4x256xf32, #tpu.memory_space<vmem>>, %arg5: memref<8x256xf32, #tpu.memory_space<vmem>>, %arg6: memref<1x1xf32, #tpu.memory_space<smem>>, %arg7: memref<1x1x8xf32, #tpu.memory_space<vmem>>) attributes {dimension_semantics = [#tpu.dimension_semantics<parallel>], iteration_bounds = array<i64: 4>, scalar_prefetch = 0 : i64, scratch_operands = 0 : i64, tpu.core_type = #tpu.core_type<tc>, window_params = [{transform_indices = @transform_0, window_bounds = array<i64: 8, 20>}, {pipeline_mode = #tpu.pipeline_mode<synchronous>, transform_indices = @transform_1, window_bounds = array<i64: 20, 256>}, {pipeline_mode = #tpu.pipeline_mode<synchronous>, transform_indices = @transform_2, window_bounds = array<i64: 256, 256>}, {pipeline_mode = #tpu.pipeline_mode<synchronous>, transform_indices = @transform_3, window_bounds = array<i64: 4, 256>}, {pipeline_mode = #tpu.pipeline_mode<synchronous>, transform_indices = @transform_4, window_bounds = array<i64: 8, 256>}, {transform_indices = @transform_5, window_bounds = array<i64: 1, 1>}, {transform_indices = @transform_6, window_bounds = array<i64: 1, 1, 8>}]} {
    %c0 = arith.constant 0 : index
    %c0_0 = arith.constant 0 : index
    %0 = vector.load %arg1[%c0, %c0_0] : memref<8x20xf32, #tpu.memory_space<vmem>>, vector<8x20xf32>
    %1 = arith.truncf %0 : vector<8x20xf32> to vector<8x20xbf16>
    %c0_1 = arith.constant 0 : index
    %c0_2 = arith.constant 0 : index
    %2 = vector.load %arg2[%c0_1, %c0_2] : memref<20x256xbf16, #tpu.memory_space<vmem>>, vector<20x256xbf16>
    %cst = arith.constant dense<0.000000e+00> : vector<8x256xf32>
    %3 = tpu.matmul %1, %2, %cst {dimension_numbers = #tpu.dot_dimension_numbers<[1], [0], [0], [1], [0, 0, 1, 1], [], []>} : vector<8x20xbf16>, vector<20x256xbf16>, vector<8x256xf32> -> vector<8x256xf32>
    %c0_3 = arith.constant 0 : index
    %c0_4 = arith.constant 0 : index
    %4 = vector.load %arg5[%c0_3, %c0_4] : memref<8x256xf32, #tpu.memory_space<vmem>>, vector<1x256xf32>
    %5 = vector.broadcast %4 : vector<1x256xf32> to vector<8x256xf32>
    %6 = arith.addf %3, %5 : vector<8x256xf32>
    %c1 = arith.constant 1 : index
    %c0_5 = arith.constant 0 : index
    %7 = vector.load %arg5[%c1, %c0_5] : memref<8x256xf32, #tpu.memory_space<vmem>>, vector<1x256xf32>
    %c2 = arith.constant 2 : index
    %c0_6 = arith.constant 0 : index
    %8 = vector.load %arg5[%c2, %c0_6] : memref<8x256xf32, #tpu.memory_space<vmem>>, vector<1x256xf32>
    %cst_7 = arith.constant dense<0.000000e+00> : vector<8xf32>
    %9 = vector.multi_reduction <add>, %6, %cst_7 [1] : vector<8x256xf32> to vector<8xf32>
    %10 = vector.shape_cast %9 : vector<8xf32> to vector<8x1xf32>
    %cst_8 = arith.constant 2.560000e+02 : f32
    %11 = vector.broadcast %cst_8 : f32 to vector<8x1xf32>
    %12 = arith.divf %10, %11 : vector<8x1xf32>
    %13 = vector.broadcast %12 : vector<8x1xf32> to vector<8x256xf32>
    %14 = arith.subf %6, %13 : vector<8x256xf32>
    %15 = vector.broadcast %12 : vector<8x1xf32> to vector<8x256xf32>
    %16 = arith.subf %6, %15 : vector<8x256xf32>
    %17 = arith.mulf %14, %16 : vector<8x256xf32>
    %cst_9 = arith.constant dense<0.000000e+00> : vector<8xf32>
    %18 = vector.multi_reduction <add>, %17, %cst_9 [1] : vector<8x256xf32> to vector<8xf32>
    %19 = vector.shape_cast %18 : vector<8xf32> to vector<8x1xf32>
    %cst_10 = arith.constant 2.560000e+02 : f32
    %20 = vector.broadcast %cst_10 : f32 to vector<8x1xf32>
    %21 = arith.divf %19, %20 : vector<8x1xf32>
    %22 = vector.broadcast %12 : vector<8x1xf32> to vector<8x256xf32>
    %23 = arith.subf %6, %22 : vector<8x256xf32>
    %cst_11 = arith.constant 9.99999974E-6 : f32
    %24 = vector.broadcast %cst_11 : f32 to vector<8x1xf32>
    %25 = arith.addf %21, %24 : vector<8x1xf32>
    %26 = math.rsqrt %25 : vector<8x1xf32>
    %27 = vector.broadcast %26 : vector<8x1xf32> to vector<8x256xf32>
    %28 = arith.mulf %23, %27 : vector<8x256xf32>
    %29 = vector.broadcast %7 : vector<1x256xf32> to vector<8x256xf32>
    %30 = arith.mulf %28, %29 : vector<8x256xf32>
    %31 = vector.broadcast %8 : vector<1x256xf32> to vector<8x256xf32>
    %32 = arith.addf %30, %31 : vector<8x256xf32>
    %cst_12 = arith.constant 0.000000e+00 : f32
    %33 = vector.broadcast %cst_12 : f32 to vector<8x256xf32>
    %34 = arith.maximumf %32, %33 : vector<8x256xf32>
    %35 = arith.truncf %34 : vector<8x256xf32> to vector<8x256xbf16>
    %c0_13 = arith.constant 0 : index
    %c0_14 = arith.constant 0 : index
    %36 = vector.load %arg3[%c0_13, %c0_14] : memref<256x256xbf16, #tpu.memory_space<vmem>>, vector<256x256xbf16>
    %cst_15 = arith.constant dense<0.000000e+00> : vector<8x256xf32>
    %37 = tpu.matmul %35, %36, %cst_15 {dimension_numbers = #tpu.dot_dimension_numbers<[1], [0], [0], [1], [0, 0, 1, 1], [], []>} : vector<8x256xbf16>, vector<256x256xbf16>, vector<8x256xf32> -> vector<8x256xf32>
    %c3 = arith.constant 3 : index
    %c0_16 = arith.constant 0 : index
    %38 = vector.load %arg5[%c3, %c0_16] : memref<8x256xf32, #tpu.memory_space<vmem>>, vector<1x256xf32>
    %39 = vector.broadcast %38 : vector<1x256xf32> to vector<8x256xf32>
    %40 = arith.addf %37, %39 : vector<8x256xf32>
    %c4 = arith.constant 4 : index
    %c0_17 = arith.constant 0 : index
    %41 = vector.load %arg5[%c4, %c0_17] : memref<8x256xf32, #tpu.memory_space<vmem>>, vector<1x256xf32>
    %c5 = arith.constant 5 : index
    %c0_18 = arith.constant 0 : index
    %42 = vector.load %arg5[%c5, %c0_18] : memref<8x256xf32, #tpu.memory_space<vmem>>, vector<1x256xf32>
    %cst_19 = arith.constant dense<0.000000e+00> : vector<8xf32>
    %43 = vector.multi_reduction <add>, %40, %cst_19 [1] : vector<8x256xf32> to vector<8xf32>
    %44 = vector.shape_cast %43 : vector<8xf32> to vector<8x1xf32>
    %cst_20 = arith.constant 2.560000e+02 : f32
    %45 = vector.broadcast %cst_20 : f32 to vector<8x1xf32>
    %46 = arith.divf %44, %45 : vector<8x1xf32>
    %47 = vector.broadcast %46 : vector<8x1xf32> to vector<8x256xf32>
    %48 = arith.subf %40, %47 : vector<8x256xf32>
    %49 = vector.broadcast %46 : vector<8x1xf32> to vector<8x256xf32>
    %50 = arith.subf %40, %49 : vector<8x256xf32>
    %51 = arith.mulf %48, %50 : vector<8x256xf32>
    %cst_21 = arith.constant dense<0.000000e+00> : vector<8xf32>
    %52 = vector.multi_reduction <add>, %51, %cst_21 [1] : vector<8x256xf32> to vector<8xf32>
    %53 = vector.shape_cast %52 : vector<8xf32> to vector<8x1xf32>
    %cst_22 = arith.constant 2.560000e+02 : f32
    %54 = vector.broadcast %cst_22 : f32 to vector<8x1xf32>
    %55 = arith.divf %53, %54 : vector<8x1xf32>
    %56 = vector.broadcast %46 : vector<8x1xf32> to vector<8x256xf32>
    %57 = arith.subf %40, %56 : vector<8x256xf32>
    %cst_23 = arith.constant 9.99999974E-6 : f32
    %58 = vector.broadcast %cst_23 : f32 to vector<8x1xf32>
    %59 = arith.addf %55, %58 : vector<8x1xf32>
    %60 = math.rsqrt %59 : vector<8x1xf32>
    %61 = vector.broadcast %60 : vector<8x1xf32> to vector<8x256xf32>
    %62 = arith.mulf %57, %61 : vector<8x256xf32>
    %63 = vector.broadcast %41 : vector<1x256xf32> to vector<8x256xf32>
    %64 = arith.mulf %62, %63 : vector<8x256xf32>
    %65 = vector.broadcast %42 : vector<1x256xf32> to vector<8x256xf32>
    %66 = arith.addf %64, %65 : vector<8x256xf32>
    %c0_24 = arith.constant 0 : index
    %c0_25 = arith.constant 0 : index
    %67 = vector.load %arg4[%c0_24, %c0_25] : memref<4x256xf32, #tpu.memory_space<vmem>>, vector<4x256xf32>
    %c6 = arith.constant 6 : index
    %c0_26 = arith.constant 0 : index
    %68 = vector.load %arg5[%c6, %c0_26] : memref<8x256xf32, #tpu.memory_space<vmem>>, vector<1x256xf32>
    %69 = vector.shape_cast %68 : vector<1x256xf32> to vector<1x256xf32>
    %70 = vector.broadcast %69 : vector<1x256xf32> to vector<8x256xf32>
    %71 = vector.extract_strided_slice %0 {offsets = [0, 16], sizes = [8, 1], strides = [1, 1]} : vector<8x20xf32> to vector<8x1xf32>
    %72 = vector.extract_strided_slice %67 {offsets = [0, 0], sizes = [1, 256], strides = [1, 1]} : vector<4x256xf32> to vector<1x256xf32>
    %73 = vector.broadcast %71 : vector<8x1xf32> to vector<8x256xf32>
    %74 = vector.broadcast %72 : vector<1x256xf32> to vector<8x256xf32>
    %75 = arith.mulf %73, %74 : vector<8x256xf32>
    %76 = arith.addf %70, %75 : vector<8x256xf32>
    %77 = vector.extract_strided_slice %0 {offsets = [0, 17], sizes = [8, 1], strides = [1, 1]} : vector<8x20xf32> to vector<8x1xf32>
    %78 = vector.extract_strided_slice %67 {offsets = [1, 0], sizes = [1, 256], strides = [1, 1]} : vector<4x256xf32> to vector<1x256xf32>
    %79 = vector.broadcast %77 : vector<8x1xf32> to vector<8x256xf32>
    %80 = vector.broadcast %78 : vector<1x256xf32> to vector<8x256xf32>
    %81 = arith.mulf %79, %80 : vector<8x256xf32>
    %82 = arith.addf %76, %81 : vector<8x256xf32>
    %83 = vector.extract_strided_slice %0 {offsets = [0, 18], sizes = [8, 1], strides = [1, 1]} : vector<8x20xf32> to vector<8x1xf32>
    %84 = vector.extract_strided_slice %67 {offsets = [2, 0], sizes = [1, 256], strides = [1, 1]} : vector<4x256xf32> to vector<1x256xf32>
    %85 = vector.broadcast %83 : vector<8x1xf32> to vector<8x256xf32>
    %86 = vector.broadcast %84 : vector<1x256xf32> to vector<8x256xf32>
    %87 = arith.mulf %85, %86 : vector<8x256xf32>
    %88 = arith.addf %82, %87 : vector<8x256xf32>
    %89 = vector.extract_strided_slice %0 {offsets = [0, 19], sizes = [8, 1], strides = [1, 1]} : vector<8x20xf32> to vector<8x1xf32>
    %90 = vector.extract_strided_slice %67 {offsets = [3, 0], sizes = [1, 256], strides = [1, 1]} : vector<4x256xf32> to vector<1x256xf32>
    %91 = vector.broadcast %89 : vector<8x1xf32> to vector<8x256xf32>
    %92 = vector.broadcast %90 : vector<1x256xf32> to vector<8x256xf32>
    %93 = arith.mulf %91, %92 : vector<8x256xf32>
    %94 = arith.addf %88, %93 : vector<8x256xf32>
    %cst_27 = arith.constant 0.000000e+00 : f32
    %95 = vector.broadcast %cst_27 : f32 to vector<8x256xf32>
    %96 = arith.maximumf %94, %95 : vector<8x256xf32>
    %97 = arith.addf %66, %96 : vector<8x256xf32>
    %cst_28 = arith.constant 0.000000e+00 : f32
    %98 = vector.broadcast %cst_28 : f32 to vector<8x256xf32>
    %99 = arith.maximumf %97, %98 : vector<8x256xf32>
    %c7 = arith.constant 7 : index
    %c0_29 = arith.constant 0 : index
    %100 = vector.load %arg5[%c7, %c0_29] : memref<8x256xf32, #tpu.memory_space<vmem>>, vector<1x256xf32>
    %101 = arith.truncf %100 : vector<1x256xf32> to vector<1x256xbf16>
    %102 = arith.truncf %99 : vector<8x256xf32> to vector<8x256xbf16>
    %cst_30 = arith.constant dense<0.000000e+00> : vector<1x8xf32>
    %103 = tpu.matmul %101, %102, %cst_30 {dimension_numbers = #tpu.dot_dimension_numbers<[1], [1], [0], [0], [0, 0, 1, 0], [], []>} : vector<1x256xbf16>, vector<8x256xbf16>, vector<1x8xf32> -> vector<1x8xf32>
    %c0_31 = arith.constant 0 : index
    %c0_32 = arith.constant 0 : index
    %104 = memref.load %arg6[%c0_31, %c0_32] : memref<1x1xf32, #tpu.memory_space<smem>>
    %105 = vector.broadcast %104 : f32 to vector<1x8xf32>
    %106 = arith.addf %103, %105 : vector<1x8xf32>
    %107 = vector.shape_cast %106 : vector<1x8xf32> to vector<1x1x8xf32>
    %c0_33 = arith.constant 0 : index
    %c0_34 = arith.constant 0 : index
    %c0_35 = arith.constant 0 : index
    %108 = vector.load %arg7[%c0_33, %c0_34, %c0_35] : memref<1x1x8xf32, #tpu.memory_space<vmem>>, vector<1x1x8xf32>
    tpu.vector_store %arg7[%c0_33, %c0_34, %c0_35], %107 {strides = array<i32>} : memref<1x1x8xf32, #tpu.memory_space<vmem>>, vector<1x1x8xf32>,
    return
  }
  func.func @transform_0(%arg0: i32) -> (i32, i32) {
    %c0_i32 = arith.constant 0 : i32
    %c0_i32_0 = arith.constant 0 : i32
    return %arg0, %c0_i32 : i32, i32
  }
  func.func @transform_1(%arg0: i32) -> (i32, i32) {
    %c0_i32 = arith.constant 0 : i32
    %c0_i32_0 = arith.constant 0 : i32
    %c0_i32_1 = arith.constant 0 : i32
    return %c0_i32, %c0_i32_0 : i32, i32
  }
  func.func @transform_2(%arg0: i32) -> (i32, i32) {
    %c0_i32 = arith.constant 0 : i32
    %c0_i32_0 = arith.constant 0 : i32
    %c0_i32_1 = arith.constant 0 : i32
    return %c0_i32, %c0_i32_0 : i32, i32
  }
  func.func @transform_3(%arg0: i32) -> (i32, i32) {
    %c0_i32 = arith.constant 0 : i32
    %c0_i32_0 = arith.constant 0 : i32
    %c0_i32_1 = arith.constant 0 : i32
    return %c0_i32, %c0_i32_0 : i32, i32
  }
  func.func @transform_4(%arg0: i32) -> (i32, i32) {
    %c0_i32 = arith.constant 0 : i32
    %c0_i32_0 = arith.constant 0 : i32
    %c0_i32_1 = arith.constant 0 : i32
    return %c0_i32, %c0_i32_0 : i32, i32
  }
  func.func @transform_5(%arg0: i32) -> (i32, i32) {
    %c0_i32 = arith.constant 0 : i32
    %c0_i32_0 = arith.constant 0 : i32
    %c0_i32_1 = arith.constant 0 : i32
    return %c0_i32, %c0_i32_0 : i32, i32
  }
  func.func @transform_6(%arg0: i32) -> (i32, i32, i32) {
    %c0_i32 = arith.constant 0 : i32
    %c0_i32_0 = arith.constant 0 : i32
    %c0_i32_1 = arith.constant 0 : i32
    return %arg0, %c0_i32, %c0_i32_0 : i32, i32, i32
  }
}

</mosaic_0001>

<llo_original>
// kernel: tpu_custom_call.1
$region0: #{tpu_custom_call.1}
  #allocation0 [shape = 'u32[]', space=smem, size = 0x4, offset = 0x4, fixed_abs, tag = 'smem constant byte address 0x4 - core index']
  #allocation1 [shape = 'u32[144,128]{1,0:T(1,128)}', space=vmem, size = 0x12000, scoped, tag = 'internal scratch']
  #allocation2 [shape = 'f32[1,1]{1,0:T(1,128)S(6)}', space=smem, size = 0x200, scoped, tag = 'scoped memory for tpu_custom_call.1']
  %s0 = inlined_call_operand.vmem [shape: f32[32,20], index: 0, kind: input, shape index: {}]
  %s1 = inlined_call_operand.vmem [shape: bf16[20,256], index: 1, kind: input, shape index: {}]
  %s2 = inlined_call_operand.hbm [shape: bf16[256,256], index: 2, kind: input, shape index: {}]
  %s3 = inlined_call_operand.vmem [shape: f32[4,256], index: 3, kind: input, shape index: {}]
  %s4 = inlined_call_operand.vmem [shape: f32[8,256], index: 4, kind: input, shape index: {}]
  %s5 = inlined_call_operand.<no memory space> [shape: f32[1,1], index: 5, kind: input, shape index: {}]
  %s6 = inlined_call_operand.hbm [shape: f32[4,1,8], index: 6, kind: output, shape index: {}]
  %s7 = sld [smem:[#allocation0]]
  $region61: #{tpu_custom_call.1} parent=0
    _
  %s9 = ssub.s32 1, %s7
  %s10 = scalar_select 0, %s9, %s7
  %11 = sst [smem:[#allocation2]] %s5
  $region1: #{tpu_custom_call.1} parent=0
    #allocation3 [shape = 'u8[131072]{0}', space=vmem, size = 0x20000, scoped, tag = 'input window, operand 2, single buffered']
    #allocation4 [shape = 's32[2]{0}', space=sflag, size = 0x8, scoped, tag = 'scoped memory for tpu_custom_call.1']
    #allocation5 [shape = 's32[2]{0}', space=sflag, size = 0x8, scoped, tag = 'scoped memory for tpu_custom_call.1']
    #allocation6 [shape = 'u8[1024]{0}', space=vmem, size = 0x400, scoped, tag = 'output window, operand 0']
    %12 = vsyncpa [#allocation4], 0
    %13 = vsyncpa [#allocation5], 0
    %s14 = scalar_lea.sflag [#allocation5], 1
    %15 = vsyncpa %s14, 0
    loop: start=0, step=1, limit=6
    $region2: #{tpu_custom_call.1} parent=1 // loop_pre_header
      _
    $region3: #{tpu_custom_call.1} parent=1 // loop_header
      %s17 = sphi 0, %s21
      %p18 = scmp.ge.s32.totalorder %s17, 6
      %s27 = sphi 0, %s29
      %s30 = sphi 0, %s27
      %s31 = sphi 0, %s30
      %s47 = sphi 0, %s31
      %s51 = sphi 0, %s51
      %s53 = sphi 0, %s51
      %s54 = sphi 0, %s53
      %s68 = sphi 0, %s54
      %s72 = sphi 0, %s72
      %s74 = sphi 0, %s72
      %s75 = sphi 0, %s74
      %s89 = sphi 0, %s75
      %s93 = sphi 0, %s93
      %s95 = sphi 0, %s93
      %s96 = sphi 0, %s95
      %s110 = sphi 0, %s96
      %s114 = sphi 0, %s114
      %s116 = sphi 0, %s114
      %s117 = sphi 0, %s116
      %s131 = sphi 0, %s117
      %s135 = sphi 0, %s135
      %s137 = sphi 0, %s135
      %s138 = sphi 0, %s137
      %s152 = sphi 0, %s138
      %s158 = sphi 0, %s160
      %s161 = sphi 0, %s158
      %s162 = sphi 0, %s161
      %s178 = sphi 0, %s162
    $region4: #{tpu_custom_call.1} parent=1 // loop_header_branch
      %20 = sbr.rel (%p18) target = $region8
    $region5: #{tpu_custom_call.1} parent=1 // loop_body
      %s22 = ssub.s32 %s17, 1
      %s23 = ssub.s32 %s17, 2
      %s24 = sadd.s32 %s17, 1
      %s25 = ssub.s32 %s17, %s24
      %p26 = scmp.eq.s32.totalorder %s25, 0
      %s28 = sadd.s32 %s27, 1
      %s29 = scalar_select %p26, %s27, %s28
      %p32 = pneg %p26
      %p33 = scmp.eq.s32.totalorder %s17, 3
      %p34 = por %p32, %p33
      %p35 = scmp.ne.s32.totalorder %s27, %s30
      %p36 = scmp.eq.s32.totalorder %s17, 0
      %p37 = por %p35, %p36
      %p38 = scmp.ne.s32.totalorder %s27, %s30
      %p39 = scmp.eq.s32.totalorder %s22, 3
      %p40 = por %p38, %p39
      %p41 = scmp.ne.s32.totalorder %s30, %s31
      %p42 = scmp.eq.s32.totalorder %s22, 0
      %p43 = por %p41, %p42
      %p44 = scmp.ne.s32.totalorder %s30, %s31
      %p45 = scmp.eq.s32.totalorder %s23, 3
      %p46 = por %p44, %p45
      %p48 = scmp.ne.s32.totalorder %s31, %s47
      %p49 = scmp.eq.s32.totalorder %s23, 0
      %p50 = por %p48, %p49
      %s52 = sadd.s32 %s51, 1
      %p55 = scmp.eq.s32.totalorder %s17, 3
      %p56 = scmp.ne.s32.totalorder %s51, %s53
      %p57 = scmp.eq.s32.totalorder %s17, 0
      %p58 = por %p56, %p57
      %p59 = scmp.ne.s32.totalorder %s51, %s53
      %p60 = scmp.eq.s32.totalorder %s22, 3
      %p61 = por %p59, %p60
      %p62 = scmp.ne.s32.totalorder %s53, %s54
      %p63 = scmp.eq.s32.totalorder %s22, 0
      %p64 = por %p62, %p63
      %p65 = scmp.ne.s32.totalorder %s53, %s54
      %p66 = scmp.eq.s32.totalorder %s23, 3
      %p67 = por %p65, %p66
      %p69 = scmp.ne.s32.totalorder %s54, %s68
      %p70 = scmp.eq.s32.totalorder %s23, 0
      %p71 = por %p69, %p70
      %s73 = sadd.s32 %s72, 1
      %p76 = scmp.eq.s32.totalorder %s17, 3
      %p77 = scmp.ne.s32.totalorder %s72, %s74
      %p78 = scmp.eq.s32.totalorder %s17, 0
      %p79 = por %p77, %p78
      %p80 = scmp.ne.s32.totalorder %s72, %s74
      %p81 = scmp.eq.s32.totalorder %s22, 3
      %p82 = por %p80, %p81
      %p83 = scmp.ne.s32.totalorder %s74, %s75
      %p84 = scmp.eq.s32.totalorder %s22, 0
      %p85 = por %p83, %p84
      %p86 = scmp.ne.s32.totalorder %s74, %s75
      %p87 = scmp.eq.s32.totalorder %s23, 3
      %p88 = por %p86, %p87
      %p90 = scmp.ne.s32.totalorder %s75, %s89
      %p91 = scmp.eq.s32.totalorder %s23, 0
      %p92 = por %p90, %p91
      %s94 = sadd.s32 %s93, 1
      %p97 = scmp.eq.s32.totalorder %s17, 3
      %p98 = scmp.ne.s32.totalorder %s93, %s95
      %p99 = scmp.eq.s32.totalorder %s17, 0
      %p100 = por %p98, %p99
      %p101 = scmp.ne.s32.totalorder %s93, %s95
      %p102 = scmp.eq.s32.totalorder %s22, 3
      %p103 = por %p101, %p102
      %p104 = scmp.ne.s32.totalorder %s95, %s96
      %p105 = scmp.eq.s32.totalorder %s22, 0
      %p106 = por %p104, %p105
      %p107 = scmp.ne.s32.totalorder %s95, %s96
      %p108 = scmp.eq.s32.totalorder %s23, 3
      %p109 = por %p107, %p108
      %p111 = scmp.ne.s32.totalorder %s96, %s110
      %p112 = scmp.eq.s32.totalorder %s23, 0
      %p113 = por %p111, %p112
      %s115 = sadd.s32 %s114, 1
      %p118 = scmp.eq.s32.totalorder %s17, 3
      %p119 = scmp.ne.s32.totalorder %s114, %s116
      %p120 = scmp.eq.s32.totalorder %s17, 0
      %p121 = por %p119, %p120
      %p122 = scmp.ne.s32.totalorder %s114, %s116
      %p123 = scmp.eq.s32.totalorder %s22, 3
      %p124 = por %p122, %p123
      %p125 = scmp.ne.s32.totalorder %s116, %s117
      %p126 = scmp.eq.s32.totalorder %s22, 0
      %p127 = por %p125, %p126
      %p128 = scmp.ne.s32.totalorder %s116, %s117
      %p129 = scmp.eq.s32.totalorder %s23, 3
      %p130 = por %p128, %p129
      %p132 = scmp.ne.s32.totalorder %s117, %s131
      %p133 = scmp.eq.s32.totalorder %s23, 0
      %p134 = por %p132, %p133
      %s136 = sadd.s32 %s135, 1
      %p139 = scmp.eq.s32.totalorder %s17, 3
      %p140 = scmp.ne.s32.totalorder %s135, %s137
      %p141 = scmp.eq.s32.totalorder %s17, 0
      %p142 = por %p140, %p141
      %p143 = scmp.ne.s32.totalorder %s135, %s137
      %p144 = scmp.eq.s32.totalorder %s22, 3
      %p145 = por %p143, %p144
      %p146 = scmp.ne.s32.totalorder %s137, %s138
      %p147 = scmp.eq.s32.totalorder %s22, 0
      %p148 = por %p146, %p147
      %p149 = scmp.ne.s32.totalorder %s137, %s138
      %p150 = scmp.eq.s32.totalorder %s23, 3
      %p151 = por %p149, %p150
      %p153 = scmp.ne.s32.totalorder %s138, %s152
      %p154 = scmp.eq.s32.totalorder %s23, 0
      %p155 = por %p153, %p154
      %s156 = ssub.s32 %s17, %s24
      %p157 = scmp.eq.s32.totalorder %s156, 0
      %s159 = sadd.s32 %s158, 1
      %s160 = scalar_select %p157, %s158, %s159
      %p163 = pneg %p157
      %p164 = scmp.eq.s32.totalorder %s17, 3
      %p165 = por %p163, %p164
      %p166 = scmp.ne.s32.totalorder %s158, %s161
      %p167 = scmp.eq.s32.totalorder %s17, 0
      %p168 = por %p166, %p167
      %p169 = scmp.ne.s32.totalorder %s158, %s161
      %p170 = scmp.eq.s32.totalorder %s22, 3
      %p171 = por %p169, %p170
      %p172 = scmp.ne.s32.totalorder %s161, %s162
      %p173 = scmp.eq.s32.totalorder %s22, 0
      %p174 = por %p172, %p173
      %p175 = scmp.ne.s32.totalorder %s161, %s162
      %p176 = scmp.eq.s32.totalorder %s23, 3
      %p177 = por %p175, %p176
      %p179 = scmp.ne.s32.totalorder %s162, %s178
      %p180 = scmp.eq.s32.totalorder %s23, 0
      %p181 = por %p179, %p180
      %p182 = scmp.le.s32.totalorder 1, %s17
      %p183 = scmp.lt.s32.totalorder %s17, 5
      %p184 = pnand %p182, %p183
      %p185 = pneg %p184
      // Predicated region
      $region9: #{tpu_custom_call.1} parent=5 // pred_check
        _
      $region10: #{tpu_custom_call.1} parent=5 // pred_check_branch
        %187 = sbr.rel (%p184) target = $region12
      $region11: #{tpu_custom_call.1} parent=5 // pred_region
        %s188 = ssub.s32 %s17, 1
        // Predicated region
        $region13: #{tpu_custom_call.1} parent=11 // pred_check
          %p189 = pneg %p64
        $region14: #{tpu_custom_call.1} parent=11 // pred_check_branch
          %191 = sbr.rel (%p189) target = $region16
        $region15: #{tpu_custom_call.1} parent=11 // pred_region
          _
        $region16: #{tpu_custom_call.1} parent=11 // pred_fallthru
          _
        // Predicated region
        $region17: #{tpu_custom_call.1} parent=11 // pred_check
          %p192 = pneg %p85
        $region18: #{tpu_custom_call.1} parent=11 // pred_check_branch
          %194 = sbr.rel (%p192) target = $region20
        $region19: #{tpu_custom_call.1} parent=11 // pred_region
          %s196 = ssub.s32 4096, 4096
          %197 = vsyncadd [#allocation4], %s196
          %s198 = sshll.u32 [#allocation3], 4
          %s199 = int_to_ptr.vmem [resolvable:$true] %s198
          %204 = dma.hbm_to_vmem [thread:$0]  %s2, 4096, %s199, [#allocation4], 128, 128, 8
        $region20: #{tpu_custom_call.1} parent=11 // pred_fallthru
          _
        // Predicated region
        $region21: #{tpu_custom_call.1} parent=11 // pred_check
          %p205 = pneg %p106
        $region22: #{tpu_custom_call.1} parent=11 // pred_check_branch
          %207 = sbr.rel (%p205) target = $region24
        $region23: #{tpu_custom_call.1} parent=11 // pred_region
          _
        $region24: #{tpu_custom_call.1} parent=11 // pred_fallthru
          _
        // Predicated region
        $region25: #{tpu_custom_call.1} parent=11 // pred_check
          %p208 = pneg %p127
        $region26: #{tpu_custom_call.1} parent=11 // pred_check_branch
          %210 = sbr.rel (%p208) target = $region28
        $region27: #{tpu_custom_call.1} parent=11 // pred_region
          _
        $region28: #{tpu_custom_call.1} parent=11 // pred_fallthru
          _
        // Predicated region
        $region29: #{tpu_custom_call.1} parent=11 // pred_check
          %p211 = pneg %p148
        $region30: #{tpu_custom_call.1} parent=11 // pred_check_branch
          %213 = sbr.rel (%p211) target = $region32
        $region31: #{tpu_custom_call.1} parent=11 // pred_region
          _
        $region32: #{tpu_custom_call.1} parent=11 // pred_fallthru
          _
      $region12: #{tpu_custom_call.1} parent=5 // pred_fallthru
        _
      %p214 = scmp.lt.s32.totalorder %s17, 4
      // Predicated region
      $region33: #{tpu_custom_call.1} parent=5 // pred_check
        %p215 = pneg %p214
      $region34: #{tpu_custom_call.1} parent=5 // pred_check_branch
        %217 = sbr.rel (%p215) target = $region36
      $region35: #{tpu_custom_call.1} parent=5 // pred_region
        // Predicated region
        $region37: #{tpu_custom_call.1} parent=35 // pred_check
          %p218 = pneg %p37
        $region38: #{tpu_custom_call.1} parent=35 // pred_check_branch
          %220 = sbr.rel (%p218) target = $region40
        $region39: #{tpu_custom_call.1} parent=35 // pred_region
          %p221 = scmp.lt.s32.totalorder %s17, 3
          %s222 = scalar_select %p221, %s17, 3
          %s223 = smul.addr %s222, 8
          %s224 = scalar_lea.vmem %s0, %s223
        $region40: #{tpu_custom_call.1} parent=35 // pred_fallthru
          _
      $region36: #{tpu_custom_call.1} parent=5 // pred_fallthru
        _
      %p225 = scmp.le.s32.totalorder 1, %s17
      %p226 = scmp.lt.s32.totalorder %s17, 5
      %p227 = pnand %p225, %p226
      %p228 = pneg %p227
      // Predicated region
      $region41: #{tpu_custom_call.1} parent=5 // pred_check
        _
      $region42: #{tpu_custom_call.1} parent=5 // pred_check_branch
        %230 = sbr.rel (%p227) target = $region44
      $region43: #{tpu_custom_call.1} parent=5 // pred_region
        %s231 = ssub.s32 %s17, 1
        // Predicated region
        $region45: #{tpu_custom_call.1} parent=43 // pred_check
          %p232 = pneg %p85
        $region46: #{tpu_custom_call.1} parent=43 // pred_check_branch
          %234 = sbr.rel (%p232) target = $region48
        $region47: #{tpu_custom_call.1} parent=43 // pred_region
          %235 = dma.done [#allocation4], 4096
        $region48: #{tpu_custom_call.1} parent=43 // pred_fallthru
          _
        %p236 = scmp.lt.s32.totalorder %s22, 3
        %s237 = scalar_select %p236, %s22, 3
        %s238 = smul.addr %s237, 8
        %s239 = scalar_lea.vmem %s0, %s238
        %p240 = pneg %p43
        %p241 = pneg %p40
        %p242 = pneg %p64
        %p243 = pneg %p61
        %p244 = pneg %p85
        %p245 = pneg %p82
        %p246 = pneg %p106
        %p247 = pneg %p103
        %p248 = pneg %p127
        %p249 = pneg %p124
        %p250 = pneg %p148
        %p251 = pneg %p145
        %p252 = pneg %p174
        %p253 = pneg %p171
        %s254 = sand.u32 %s161, 1
        %s255 = scalar_lea.sflag [#allocation5], %s254
        %s256 = sand.u32 %s161, 1
        %s257 = scalar_lea.vmem [#allocation6], %s256
        %p258 = scmp.lt.s32.totalorder %s22, 3
        %s259 = scalar_select %p258, %s22, 3
        %s260 = smul.addr %s259, 8
        %s261 = scalar_lea.vmem %s0, %s260
        %v263 = vld [vmem:[%s261] sm:$0xff]
        %v264 = vpack.c.bf16 %v263, %v263
        %v265 = vld [vmem:[%s1] sm:$0xff]
        %v266 = vld [vmem:[%s1 + $0x8] sm:$0xff]
        %v267 = vld [vmem:[%s1 + $0x10] sm:$0x33]
        %v268 = vld [vmem:[%s4] ss:$8 sm:$0x3]
        %v270 = vlaneseq
        %v271 = vshrl.u32 %v270, 7
        %v272 = vsub.s32 0, %v271
        %v273 = vrot.slane %v268, %v272
        %v274 = vlaneseq
        %v275 = vshrl.u32 %v274, 7
        %v276 = vsub.s32 1, %v275
        %v277 = vrot.slane %v268, %v276
        %v283 = vunpack.c.l.b16 %v265
        %v284 = vunpack.c.h.b16 %v265
        %v285 = vunpack.c.l.b16 %v266
        %v286 = vunpack.c.h.b16 %v266
        %v287 = vunpack.c.l.b16 %v267
        %v288 = vunpack.c.h.b16 %v267
        %v289 = vpack.c.b16 %v285, %v283
        %v290 = vpack.c.b16 %v286, %v284
        %v291 = vpack.c.b16 %v287, %v287
        %v292 = vpack.c.b16 %v288, %v288
        %vm295 = vcmask 162816
        %v297 = vsel %vm295, %v264, 0
        %vm299 = vcmask 1041408
        %v301 = vsel %vm299, %v291, 0
        %v304 = vsel %vm299, %v292, 0
        %306 = vmatprep.subr.bf16.mxu0 %v290
        %307 = vmatpush1.bf16.msra.mxu0 %v289
        %308 = vmatprep.subr.bf16.mxu0 %v304
        %309 = vmatpush1.bf16.msra.mxu0 %v301
        %310 = vmatprep.subr.bf16.mxu0 0
        %311 = vmatpush1.bf16.msra.mxu0 0
        %312 = vmatprep.subr.bf16.mxu0 0
        %313 = vmatpush1.bf16.msra.mxu0 0
        %314 = vmatprep.subr.bf16.mxu0 0
        %315 = vmatpush1.bf16.msra.mxu0 0
        %316 = vmatprep.subr.bf16.mxu0 0
        %317 = vmatpush1.bf16.msra.mxu0 0
        %318 = vmatprep.subr.bf16.mxu0 0
        %319 = vmatpush1.bf16.msra.mxu0 0
        %320 = vmatprep.subr.bf16.mxu0 0
        %321 = vmatpush1.bf16.msra.mxu0 0
        %322 = vmatprep.subr.bf16.mxu0 0
        %323 = vmatpush1.bf16.msra.mxu0 0
        %324 = vmatprep.subr.bf16.mxu0 0
        %325 = vmatpush1.bf16.msra.mxu0 0
        %326 = vmatprep.subr.bf16.mxu0 0
        %327 = vmatpush1.bf16.msra.mxu0 0
        %328 = vmatprep.subr.bf16.mxu0 0
        %329 = vmatpush1.bf16.msra.mxu0 0
        %330 = vmatprep.subr.bf16.mxu0 0
        %331 = vmatpush1.bf16.msra.mxu0 0
        %332 = vmatprep.subr.bf16.mxu0 0
        %333 = vmatpush1.bf16.msra.mxu0 0
        %334 = vmatprep.subr.bf16.mxu0 0
        %335 = vmatpush1.bf16.msra.mxu0 0
        %336 = vmatprep.subr.bf16.mxu0 0
        %337 = vmatpush1.bf16.msra.mxu0 0
        %338 = vmatprep.mubr.bf16.mxu0 0
        %339 = vmatmul.mubr.bf16.gmra.mrb[0].mxu0 %v297
        %v340 = vpop.f32.mrb[0].mxu0
        %v341 = vadd.f32 %v273, %v340
        %v342 = vpop.f32.mrb[0].mxu0
        %v343 = vadd.f32 %v277, %v342
        %v344 = vpop.f32.mrb[0].mxu0
        %v345 = vpop.f32.mrb[0].mxu0
        %346 = vdwg.mxu0
        %s347 = scalar_lea.vmem %s4, 1
        %v348 = vld [vmem:[%s347] ss:$8 sm:$0x3]
        %s349 = scalar_lea.vmem %s4, 2
        %v350 = vld [vmem:[%s349] ss:$8 sm:$0x3]
        %v351 = vadd.f32 %v341, %v343
        %352 = vadd.xlane.f32.xlu0 %v351
        %v353 = vpop.xlane.xlu0 %352
        %v354 = vrcp.pop 256.0
        %v355 = vmul.f32 %v353, %v354
        %v356 = vsub.f32 %v341, %v355
        %v357 = vsub.f32 %v343, %v355
        %v358 = vmul.f32 %v356, %v356
        %v359 = vmul.f32 %v357, %v357
        %v360 = vadd.f32 %v358, %v359
        %361 = vadd.xlane.f32.xlu0 %v360
        %v362 = vpop.xlane.xlu0 %361
        %v363 = vmul.f32 %v362, %v354
        %v364 = vadd.f32 %v363, 1e-05
        %v365 = vrsqrt.pop %v364
        %v366 = vmul.f32 %v356, %v365
        %v367 = vmul.f32 %v357, %v365
        %v369 = vlaneseq
        %v370 = vshrl.u32 %v369, 7
        %v371 = vsub.s32 0, %v370
        %v372 = vrot.slane %v348, %v371
        %v373 = vlaneseq
        %v374 = vshrl.u32 %v373, 7
        %v375 = vsub.s32 1, %v374
        %v376 = vrot.slane %v348, %v375
        %v379 = vmul.f32 %v366, %v372
        %v380 = vmul.f32 %v367, %v376
        %v382 = vlaneseq
        %v383 = vshrl.u32 %v382, 7
        %v384 = vsub.s32 0, %v383
        %v385 = vrot.slane %v350, %v384
        %v386 = vlaneseq
        %v387 = vshrl.u32 %v386, 7
        %v388 = vsub.s32 1, %v387
        %v389 = vrot.slane %v350, %v388
        %v392 = vadd.f32 %v379, %v385
        %v393 = vadd.f32 %v380, %v389
        %v394 = vmax.f32 %v392, 0.0
        %v395 = vmax.f32 %v393, 0.0
        %v396 = vpack.c.bf16 %v394, %v394
        %v397 = vpack.c.bf16 %v395, %v395
        %v398 = vld [vmem:[#allocation3] sm:$0xff]
        %v399 = vld [vmem:[#allocation3 + $0x8] sm:$0xff]
        %v400 = vld [vmem:[#allocation3 + $0x10] sm:$0xff]
        %v401 = vld [vmem:[#allocation3 + $0x18] sm:$0xff]
        %v402 = vld [vmem:[#allocation3 + $0x20] sm:$0xff]
        %v403 = vld [vmem:[#allocation3 + $0x28] sm:$0xff]
        %v404 = vld [vmem:[#allocation3 + $0x30] sm:$0xff]
        %v405 = vld [vmem:[#allocation3 + $0x38] sm:$0xff]
        %v406 = vld [vmem:[#allocation3 + $0x40] sm:$0xff]
        %v407 = vld [vmem:[#allocation3 + $0x48] sm:$0xff]
        %v408 = vld [vmem:[#allocation3 + $0x50] sm:$0xff]
        %v409 = vld [vmem:[#allocation3 + $0x58] sm:$0xff]
        %v410 = vld [vmem:[#allocation3 + $0x60] sm:$0xff]
        %v411 = vld [vmem:[#allocation3 + $0x68] sm:$0xff]
        %v412 = vld [vmem:[#allocation3 + $0x70] sm:$0xff]
        %v413 = vld [vmem:[#allocation3 + $0x78] sm:$0xff]
        %v414 = vld [vmem:[#allocation3 + $0x80] sm:$0xff]
        %v415 = vld [vmem:[#allocation3 + $0x88] sm:$0xff]
        %v416 = vld [vmem:[#allocation3 + $0x90] sm:$0xff]
        %v417 = vld [vmem:[#allocation3 + $0x98] sm:$0xff]
        %v418 = vld [vmem:[#allocation3 + $0xa0] sm:$0xff]
        %v419 = vld [vmem:[#allocation3 + $0xa8] sm:$0xff]
        %v420 = vld [vmem:[#allocation3 + $0xb0] sm:$0xff]
        %v421 = vld [vmem:[#allocation3 + $0xb8] sm:$0xff]
        %v422 = vld [vmem:[#allocation3 + $0xc0] sm:$0xff]
        %v423 = vld [vmem:[#allocation3 + $0xc8] sm:$0xff]
        %v424 = vld [vmem:[#allocation3 + $0xd0] sm:$0xff]
        %v425 = vld [vmem:[#allocation3 + $0xd8] sm:$0xff]
        %v426 = vld [vmem:[#allocation3 + $0xe0] sm:$0xff]
        %v427 = vld [vmem:[#allocation3 + $0xe8] sm:$0xff]
        %v428 = vld [vmem:[#allocation3 + $0xf0] sm:$0xff]
        %v429 = vld [vmem:[#allocation3 + $0xf8] sm:$0xff]
        %s430 = scalar_lea.vmem %s4, 3
        %v431 = vld [vmem:[%s430] ss:$8 sm:$0x3]
        %v433 = vlaneseq
        %v434 = vshrl.u32 %v433, 7
        %v435 = vsub.s32 0, %v434
        %v436 = vrot.slane %v431, %v435
        %v437 = vlaneseq
        %v438 = vshrl.u32 %v437, 7
        %v439 = vsub.s32 1, %v438
        %v440 = vrot.slane %v431, %v439
        %v475 = vunpack.c.l.b16 %v398
        %v476 = vunpack.c.h.b16 %v398
        %v477 = vunpack.c.l.b16 %v399
        %v478 = vunpack.c.h.b16 %v399
        %v479 = vunpack.c.l.b16 %v400
        %v480 = vunpack.c.h.b16 %v400
        %v481 = vunpack.c.l.b16 %v401
        %v482 = vunpack.c.h.b16 %v401
        %v483 = vunpack.c.l.b16 %v402
        %v484 = vunpack.c.h.b16 %v402
        %v485 = vunpack.c.l.b16 %v403
        %v486 = vunpack.c.h.b16 %v403
        %v487 = vunpack.c.l.b16 %v404
        %v488 = vunpack.c.h.b16 %v404
        %v489 = vunpack.c.l.b16 %v405
        %v490 = vunpack.c.h.b16 %v405
        %v491 = vunpack.c.l.b16 %v406
        %v492 = vunpack.c.h.b16 %v406
        %v493 = vunpack.c.l.b16 %v407
        %v494 = vunpack.c.h.b16 %v407
        %v495 = vunpack.c.l.b16 %v408
        %v496 = vunpack.c.h.b16 %v408
        %v497 = vunpack.c.l.b16 %v409
        %v498 = vunpack.c.h.b16 %v409
        %v499 = vunpack.c.l.b16 %v410
        %v500 = vunpack.c.h.b16 %v410
        %v501 = vunpack.c.l.b16 %v411
        %v502 = vunpack.c.h.b16 %v411
        %v503 = vunpack.c.l.b16 %v412
        %v504 = vunpack.c.h.b16 %v412
        %v505 = vunpack.c.l.b16 %v413
        %v506 = vunpack.c.h.b16 %v413
        %v507 = vunpack.c.l.b16 %v414
        %v508 = vunpack.c.h.b16 %v414
        %v509 = vunpack.c.l.b16 %v415
        %v510 = vunpack.c.h.b16 %v415
        %v511 = vunpack.c.l.b16 %v416
        %v512 = vunpack.c.h.b16 %v416
        %v513 = vunpack.c.l.b16 %v417
        %v514 = vunpack.c.h.b16 %v417
        %v515 = vunpack.c.l.b16 %v418
        %v516 = vunpack.c.h.b16 %v418
        %v517 = vunpack.c.l.b16 %v419
        %v518 = vunpack.c.h.b16 %v419
        %v519 = vunpack.c.l.b16 %v420
        %v520 = vunpack.c.h.b16 %v420
        %v521 = vunpack.c.l.b16 %v421
        %v522 = vunpack.c.h.b16 %v421
        %v523 = vunpack.c.l.b16 %v422
        %v524 = vunpack.c.h.b16 %v422
        %v525 = vunpack.c.l.b16 %v423
        %v526 = vunpack.c.h.b16 %v423
        %v527 = vunpack.c.l.b16 %v424
        %v528 = vunpack.c.h.b16 %v424
        %v529 = vunpack.c.l.b16 %v425
        %v530 = vunpack.c.h.b16 %v425
        %v531 = vunpack.c.l.b16 %v426
        %v532 = vunpack.c.h.b16 %v426
        %v533 = vunpack.c.l.b16 %v427
        %v534 = vunpack.c.h.b16 %v427
        %v535 = vunpack.c.l.b16 %v428
        %v536 = vunpack.c.h.b16 %v428
        %v537 = vunpack.c.l.b16 %v429
        %v538 = vunpack.c.h.b16 %v429
        %v539 = vpack.c.b16 %v477, %v475
        %v540 = vpack.c.b16 %v478, %v476
        %v541 = vpack.c.b16 %v481, %v479
        %v542 = vpack.c.b16 %v482, %v480
        %v543 = vpack.c.b16 %v485, %v483
        %v544 = vpack.c.b16 %v486, %v484
        %v545 = vpack.c.b16 %v489, %v487
        %v546 = vpack.c.b16 %v490, %v488
        %v547 = vpack.c.b16 %v493, %v491
        %v548 = vpack.c.b16 %v494, %v492
        %v549 = vpack.c.b16 %v497, %v495
        %v550 = vpack.c.b16 %v498, %v496
        %v551 = vpack.c.b16 %v501, %v499
        %v552 = vpack.c.b16 %v502, %v500
        %v553 = vpack.c.b16 %v505, %v503
        %v554 = vpack.c.b16 %v506, %v504
        %v555 = vpack.c.b16 %v509, %v507
        %v556 = vpack.c.b16 %v510, %v508
        %v557 = vpack.c.b16 %v513, %v511
        %v558 = vpack.c.b16 %v514, %v512
        %v559 = vpack.c.b16 %v517, %v515
        %v560 = vpack.c.b16 %v518, %v516
        %v561 = vpack.c.b16 %v521, %v519
        %v562 = vpack.c.b16 %v522, %v520
        %v563 = vpack.c.b16 %v525, %v523
        %v564 = vpack.c.b16 %v526, %v524
        %v565 = vpack.c.b16 %v529, %v527
        %v566 = vpack.c.b16 %v530, %v528
        %v567 = vpack.c.b16 %v533, %v531
        %v568 = vpack.c.b16 %v534, %v532
        %v569 = vpack.c.b16 %v537, %v535
        %v570 = vpack.c.b16 %v538, %v536
        %603 = vmatprep.subr.bf16.mxu0 %v540
        %604 = vmatpush1.bf16.msra.mxu0 %v539
        %605 = vmatprep.subr.bf16.mxu0 %v542
        %606 = vmatpush1.bf16.msra.mxu0 %v541
        %607 = vmatprep.subr.bf16.mxu0 %v544
        %608 = vmatpush1.bf16.msra.mxu0 %v543
        %609 = vmatprep.subr.bf16.mxu0 %v546
        %610 = vmatpush1.bf16.msra.mxu0 %v545
        %611 = vmatprep.subr.bf16.mxu0 %v548
        %612 = vmatpush1.bf16.msra.mxu0 %v547
        %613 = vmatprep.subr.bf16.mxu0 %v550
        %614 = vmatpush1.bf16.msra.mxu0 %v549
        %615 = vmatprep.subr.bf16.mxu0 %v552
        %616 = vmatpush1.bf16.msra.mxu0 %v551
        %617 = vmatprep.subr.bf16.mxu0 %v554
        %618 = vmatpush1.bf16.msra.mxu0 %v553
        %619 = vmatprep.subr.bf16.mxu0 %v556
        %620 = vmatpush1.bf16.msra.mxu0 %v555
        %621 = vmatprep.subr.bf16.mxu0 %v558
        %622 = vmatpush1.bf16.msra.mxu0 %v557
        %623 = vmatprep.subr.bf16.mxu0 %v560
        %624 = vmatpush1.bf16.msra.mxu0 %v559
        %625 = vmatprep.subr.bf16.mxu0 %v562
        %626 = vmatpush1.bf16.msra.mxu0 %v561
        %627 = vmatprep.subr.bf16.mxu0 %v564
        %628 = vmatpush1.bf16.msra.mxu0 %v563
        %629 = vmatprep.subr.bf16.mxu0 %v566
        %630 = vmatpush1.bf16.msra.mxu0 %v565
        %631 = vmatprep.subr.bf16.mxu0 %v568
        %632 = vmatpush1.bf16.msra.mxu0 %v567
        %633 = vmatprep.subr.bf16.mxu0 %v570
        %634 = vmatpush1.bf16.msra.mxu0 %v569
        %635 = vmatprep.mubr.bf16.mxu0 %v397
        %636 = vmatmul.mubr.bf16.gmra.mrb[0].mxu0 %v396
        %v637 = vpop.f32.mrb[0].mxu0
        %v638 = vadd.f32 %v436, %v637
        %v639 = vpop.f32.mrb[0].mxu0
        %v640 = vadd.f32 %v440, %v639
        %v641 = vpop.f32.mrb[0].mxu0
        %v642 = vpop.f32.mrb[0].mxu0
        %643 = vdwg.mxu0
        %s644 = scalar_lea.vmem %s4, 4
        %v645 = vld [vmem:[%s644] ss:$8 sm:$0x3]
        %s646 = scalar_lea.vmem %s4, 5
        %v647 = vld [vmem:[%s646] ss:$8 sm:$0x3]
        %v648 = vadd.f32 %v638, %v640
        %649 = vadd.xlane.f32.xlu0 %v648
        %v650 = vpop.xlane.xlu0 %649
        %v651 = vmul.f32 %v650, %v354
        %v652 = vsub.f32 %v638, %v651
        %v653 = vsub.f32 %v640, %v651
        %v654 = vmul.f32 %v652, %v652
        %v655 = vmul.f32 %v653, %v653
        %v656 = vadd.f32 %v654, %v655
        %657 = vadd.xlane.f32.xlu0 %v656
        %v658 = vpop.xlane.xlu0 %657
        %v659 = vmul.f32 %v658, %v354
        %v660 = vadd.f32 %v659, 1e-05
        %v661 = vrsqrt.pop %v660
        %v662 = vmul.f32 %v652, %v661
        %v663 = vmul.f32 %v653, %v661
        %v665 = vlaneseq
        %v666 = vshrl.u32 %v665, 7
        %v667 = vsub.s32 0, %v666
        %v668 = vrot.slane %v645, %v667
        %v669 = vlaneseq
        %v670 = vshrl.u32 %v669, 7
        %v671 = vsub.s32 1, %v670
        %v672 = vrot.slane %v645, %v671
        %v675 = vmul.f32 %v662, %v668
        %v676 = vmul.f32 %v663, %v672
        %v678 = vlaneseq
        %v679 = vshrl.u32 %v678, 7
        %v680 = vsub.s32 0, %v679
        %v681 = vrot.slane %v647, %v680
        %v682 = vlaneseq
        %v683 = vshrl.u32 %v682, 7
        %v684 = vsub.s32 1, %v683
        %v685 = vrot.slane %v647, %v684
        %v688 = vadd.f32 %v675, %v681
        %v689 = vadd.f32 %v676, %v685
        %v690 = vld [vmem:[%s3] sm:$0xff]
        %s691 = scalar_lea.vmem %s4, 6
        %v692 = vld [vmem:[%s691] ss:$8 sm:$0x3]
        %v694 = vlaneseq
        %v695 = vshrl.u32 %v694, 7
        %v696 = vsub.s32 0, %v695
        %v697 = vrot.slane %v692, %v696
        %v698 = vlaneseq
        %v699 = vshrl.u32 %v698, 7
        %v700 = vsub.s32 1, %v699
        %v701 = vrot.slane %v692, %v700
        %705 = vset.pattern.permute.xlu0 16
        %706 = vperm.xlu0 %705, %v263
        %v707 = vpop.permute.xlu0 %706
        %v710 = vlaneseq
        %v711 = vshrl.u32 %v710, 7
        %v712 = vsub.s32 0, %v711
        %v713 = vrot.slane %v690, %v712
        %v714 = vlaneseq
        %v715 = vshrl.u32 %v714, 7
        %v716 = vsub.s32 4, %v715
        %v717 = vrot.slane %v690, %v716
        %v720 = vlaneseq
        %v721 = vshrl.u32 %v720, 7
        %v722 = vsub.s32 0, %v721
        %v723 = vrot.slane %v713, %v722
        %v724 = vlaneseq
        %v725 = vshrl.u32 %v724, 7
        %v726 = vsub.s32 0, %v725
        %v727 = vrot.slane %v717, %v726
        %v728 = vmul.f32 %v707, %v723
        %v729 = vmul.f32 %v707, %v727
        %v730 = vadd.f32 %v697, %v728
        %v731 = vadd.f32 %v701, %v729
        %732 = vset.pattern.permute.xlu0 17
        %733 = vperm.xlu0 %732, %v263
        %v734 = vpop.permute.xlu0 %733
        %v736 = vlaneseq
        %v737 = vshrl.u32 %v736, 7
        %v738 = vsub.s32 1, %v737
        %v739 = vrot.slane %v690, %v738
        %v740 = vlaneseq
        %v741 = vshrl.u32 %v740, 7
        %v742 = vsub.s32 5, %v741
        %v743 = vrot.slane %v690, %v742
        %v746 = vlaneseq
        %v747 = vshrl.u32 %v746, 7
        %v748 = vsub.s32 1, %v747
        %v749 = vrot.slane %v739, %v748
        %v750 = vlaneseq
        %v751 = vshrl.u32 %v750, 7
        %v752 = vsub.s32 1, %v751
        %v753 = vrot.slane %v743, %v752
        %v754 = vmul.f32 %v734, %v749
        %v755 = vmul.f32 %v734, %v753
        %v756 = vadd.f32 %v730, %v754
        %v757 = vadd.f32 %v731, %v755
        %758 = vset.pattern.permute.xlu0 18
        %759 = vperm.xlu0 %758, %v263
        %v760 = vpop.permute.xlu0 %759
        %v762 = vlaneseq
        %v763 = vshrl.u32 %v762, 7
        %v764 = vsub.s32 2, %v763
        %v765 = vrot.slane %v690, %v764
        %v766 = vlaneseq
        %v767 = vshrl.u32 %v766, 7
        %v768 = vsub.s32 6, %v767
        %v769 = vrot.slane %v690, %v768
        %v772 = vlaneseq
        %v773 = vshrl.u32 %v772, 7
        %v774 = vsub.s32 2, %v773
        %v775 = vrot.slane %v765, %v774
        %v776 = vlaneseq
        %v777 = vshrl.u32 %v776, 7
        %v778 = vsub.s32 2, %v777
        %v779 = vrot.slane %v769, %v778
        %v780 = vmul.f32 %v760, %v775
        %v781 = vmul.f32 %v760, %v779
        %v782 = vadd.f32 %v756, %v780
        %v783 = vadd.f32 %v757, %v781
        %784 = vset.pattern.permute.xlu0 19
        %785 = vperm.xlu0 %784, %v263
        %v786 = vpop.permute.xlu0 %785
        %v788 = vlaneseq
        %v789 = vshrl.u32 %v788, 7
        %v790 = vsub.s32 3, %v789
        %v791 = vrot.slane %v690, %v790
        %v792 = vlaneseq
        %v793 = vshrl.u32 %v792, 7
        %v794 = vsub.s32 7, %v793
        %v795 = vrot.slane %v690, %v794
        %v798 = vlaneseq
        %v799 = vshrl.u32 %v798, 7
        %v800 = vsub.s32 3, %v799
        %v801 = vrot.slane %v791, %v800
        %v802 = vlaneseq
        %v803 = vshrl.u32 %v802, 7
        %v804 = vsub.s32 3, %v803
        %v805 = vrot.slane %v795, %v804
        %v806 = vmul.f32 %v786, %v801
        %v807 = vmul.f32 %v786, %v805
        %v808 = vadd.f32 %v782, %v806
        %v809 = vadd.f32 %v783, %v807
        %v810 = vmax.f32 %v808, 0.0
        %v811 = vmax.f32 %v809, 0.0
        %v812 = vadd.f32 %v688, %v810
        %v813 = vadd.f32 %v689, %v811
        %v814 = vmax.f32 %v812, 0.0
        %v815 = vmax.f32 %v813, 0.0
        %s816 = scalar_lea.vmem %s4, 7
        %v817 = vld [vmem:[%s816] ss:$8 sm:$0x3]
        %v819 = vlaneseq
        %v820 = vshrl.u32 %v819, 7
        %v821 = vsub.s32 0, %v820
        %v822 = vrot.slane %v817, %v821
        %v823 = vlaneseq
        %v824 = vshrl.u32 %v823, 7
        %v825 = vsub.s32 1, %v824
        %v826 = vrot.slane %v817, %v825
        %v829 = vpack.c.bf16 %v822, %v822
        %v830 = vpack.c.bf16 %v826, %v826
        %v831 = vpack.c.bf16 %v814, %v814
        %v832 = vpack.c.bf16 %v815, %v815
        %s833 = sld [smem:[#allocation2]]
        %v834 = vstv %s833
        %835 = vmatprep.subr.bf16.mxu0 %v832
        %836 = vmatpush1.bf16.xpose.msra.mxu0 %v831
        %837 = vmatprep.subr.bf16.mxu0 0
        %838 = vmatpush1.bf16.xpose.msra.mxu0 0
        %839 = vmatprep.subr.bf16.mxu0 0
        %840 = vmatpush1.bf16.xpose.msra.mxu0 0
        %841 = vmatprep.subr.bf16.mxu0 0
        %842 = vmatpush1.bf16.xpose.msra.mxu0 0
        %843 = vmatprep.subr.bf16.mxu0 0
        %844 = vmatpush1.bf16.xpose.msra.mxu0 0
        %845 = vmatprep.subr.bf16.mxu0 0
        %846 = vmatpush1.bf16.xpose.msra.mxu0 0
        %847 = vmatprep.subr.bf16.mxu0 0
        %848 = vmatpush1.bf16.xpose.msra.mxu0 0
        %849 = vmatprep.subr.bf16.mxu0 0
        %850 = vmatpush1.bf16.xpose.msra.mxu0 0
        %851 = vmatprep.subr.bf16.mxu0 0
        %852 = vmatpush1.bf16.xpose.msra.mxu0 0
        %853 = vmatprep.subr.bf16.mxu0 0
        %854 = vmatpush1.bf16.xpose.msra.mxu0 0
        %855 = vmatprep.subr.bf16.mxu0 0
        %856 = vmatpush1.bf16.xpose.msra.mxu0 0
        %857 = vmatprep.subr.bf16.mxu0 0
        %858 = vmatpush1.bf16.xpose.msra.mxu0 0
        %859 = vmatprep.subr.bf16.mxu0 0
        %860 = vmatpush1.bf16.xpose.msra.mxu0 0
        %861 = vmatprep.subr.bf16.mxu0 0
        %862 = vmatpush1.bf16.xpose.msra.mxu0 0
        %863 = vmatprep.subr.bf16.mxu0 0
        %864 = vmatpush1.bf16.xpose.msra.mxu0 0
        %865 = vmatprep.subr.bf16.mxu0 0
        %866 = vmatpush1.bf16.xpose.msra.mxu0 0
        %867 = vmatprep.mubr.bf16.mxu0 %v830
        %868 = vmatmul.mubr.bf16.gmra.mrb[0].mxu0 %v829
        %v869 = vpop.f32.mrb[0].mxu0
        %v870 = vadd.f32 %v834, %v869
        %v871 = vpop.f32.mrb[0].mxu0
        %v872 = vpop.f32.mrb[0].mxu0
        %v873 = vpop.f32.mrb[0].mxu0
        %874 = vdwg.mxu0
        %vm875 = vcmask 57344
        %876 = vst.msk [vmem:[%s257] sm:$0x1] %vm875, %v870
        %s877 = sand.u32 %s161, 1
        %s878 = scalar_lea.sflag [#allocation5], %s877
        %s879 = sand.u32 %s161, 1
        %s880 = scalar_lea.vmem [#allocation6], %s879
        // Predicated region
        $region49: #{tpu_custom_call.1} parent=43 // pred_check
          %p881 = pneg %p171
        $region50: #{tpu_custom_call.1} parent=43 // pred_check_branch
          %883 = sbr.rel (%p881) target = $region52
        $region51: #{tpu_custom_call.1} parent=43 // pred_region
          %s885 = ssub.s32 16, 16
          %886 = vsyncadd %s878, %s885
          %s887 = smul.addr %s22, 16
          %s888 = scalar_lea.hbm %s6, %s887
          %s890 = sshll.u32 %s880, 4
          %s891 = int_to_ptr.vmem [resolvable:$true] %s890
          %893 = dma.vmem_to_hbm [thread:$0]  %s891, 16, %s888, %s878
        $region52: #{tpu_custom_call.1} parent=43 // pred_fallthru
          _
      $region44: #{tpu_custom_call.1} parent=5 // pred_fallthru
        _
      %p894 = scmp.le.s32.totalorder 2, %s17
      // Predicated region
      $region53: #{tpu_custom_call.1} parent=5 // pred_check
        %p895 = pneg %p894
      $region54: #{tpu_custom_call.1} parent=5 // pred_check_branch
        %897 = sbr.rel (%p895) target = $region56
      $region55: #{tpu_custom_call.1} parent=5 // pred_region
        %s898 = ssub.s32 %s17, 2
        // Predicated region
        $region57: #{tpu_custom_call.1} parent=55 // pred_check
          %p899 = pneg %p177
        $region58: #{tpu_custom_call.1} parent=55 // pred_check_branch
          %901 = sbr.rel (%p899) target = $region60
        $region59: #{tpu_custom_call.1} parent=55 // pred_region
          %s902 = sand.u32 %s162, 1
          %s903 = scalar_lea.sflag [#allocation5], %s902
          %s904 = sand.u32 %s162, 1
          %s905 = scalar_lea.vmem [#allocation6], %s904
          %906 = dma.done %s903, 16
        $region60: #{tpu_custom_call.1} parent=55 // pred_fallthru
          _
      $region56: #{tpu_custom_call.1} parent=5 // pred_fallthru
        _
    $region6: #{tpu_custom_call.1} parent=1 // loop_footer
      %s21 = sadd.s32 1, %s17
    $region7: #{tpu_custom_call.1} parent=1 // loop_footer_branch
      %16 = sbr.rel target = $region3
    $region8: #{tpu_custom_call.1} parent=1 // loop_exit
      _
    %907 = vsyncpa [#allocation4], 1
    %s908 = scalar_lea.sflag [#allocation4], 1
    %909 = vsyncpa %s908, 1
    %910 = vsyncpa [#allocation5], 1
    %s911 = scalar_lea.sflag [#allocation5], 1
    %912 = vsyncpa %s911, 1

</llo_original>
